<compile_context>
chip_gen: v6e
topology: v6e:2x2x1
jax: 0.10.0
libtpu: 0.0.40
codegen_flags: <defaults>
</compile_context>

<pallas_src>
import math

import jax
import jax.numpy as jnp
from jax.experimental import pallas as pl
from jax.experimental.pallas import tpu as pltpu

IN = 10   # input features
H = 4     # hidden size


def lstm_cell_kernel(xh_ref, c_ref, w_ref, b_ref, out_ref):
    """Fused LSTM cell.

    xh_ref : (B, IN+H)   [x | h] concatenated on the lane axis
    c_ref  : (B, H)      cell state
    w_ref  : (IN+H, 4H)  [Wx ; Wh] stacked on K, gates (i,f,g,o) on N
    b_ref  : (1, 4H)     bx + bh folded per gate
    out_ref: (B, 2H)     [h_new | c_new]
    """
    xh = xh_ref[...]
    c = c_ref[...]

    # Single MXU pass + single bias add for all four gates.
    pre = jnp.dot(xh, w_ref[...], preferred_element_type=jnp.float32) + b_ref[...]

    i_g = jax.nn.sigmoid(pre[:, 0 * H:1 * H])
    f_g = jax.nn.sigmoid(pre[:, 1 * H:2 * H])
    g_g = jnp.tanh(pre[:, 2 * H:3 * H])
    o_g = jax.nn.sigmoid(pre[:, 3 * H:4 * H])

    c_new = f_g * c + i_g * g_g
    h_new = o_g * jnp.tanh(c_new)

    out_ref[:, 0:H] = h_new.astype(out_ref.dtype)
    out_ref[:, H:2 * H] = c_new.astype(out_ref.dtype)


def emb_lstm_forward(x, hidden, c, w_fused, b_fused):
    """x: (B, 10), hidden/c: (B, 4). Returns (h_new, c_new), each (B, 4)."""
    B = x.shape[0]
    # Lane-axis concat done in the wrapper: pure layout plumbing, keeps the
    # kernel to one contiguous matmul operand.
    xh = jnp.concatenate([x, hidden], axis=-1).astype(jnp.float32)  # (B, 14)

    vmem = pl.BlockSpec(memory_space=pltpu.MemorySpace.VMEM)
    out = pl.pallas_call(
        lstm_cell_kernel,
        out_shape=jax.ShapeDtypeStruct((B, 2 * H), jnp.float32),
        in_specs=[vmem, vmem, vmem, vmem],
        out_specs=vmem,
    )(xh, c, w_fused, b_fused)

    return out[:, :H], out[:, H:]


def init_params(key, in_features=IN, hidden_size=H):
    """Per-gate Linear params mirroring torch.nn.Linear default init.

    Returns a list of (wx, bx, wh, bh) for gates in order (i, f, g, o), with
    wx: (4, 10), wh: (4, 4) in PyTorch (out, in) orientation.
    """
    keys = jax.random.split(key, 16)
    kx = 1.0 / math.sqrt(in_features)
    kh = 1.0 / math.sqrt(hidden_size)
    gates = []
    for g in range(4):
        wx = jax.random.uniform(keys[4 * g + 0], (hidden_size, in_features),
                                jnp.float32, -kx, kx)
        bx = jax.random.uniform(keys[4 * g + 1], (hidden_size,),
                                jnp.float32, -kx, kx)
        wh = jax.random.uniform(keys[4 * g + 2], (hidden_size, hidden_size),
                                jnp.float32, -kh, kh)
        bh = jax.random.uniform(keys[4 * g + 3], (hidden_size,),
                                jnp.float32, -kh, kh)
        gates.append((wx, bx, wh, bh))
    return gates


def fuse_params(gates):
    """Build the fused (14, 16) weight and (1, 16) bias from per-gate params."""
    w_x = jnp.concatenate([wx.T for (wx, _, _, _) in gates], axis=1)   # (10, 16)
    w_h = jnp.concatenate([wh.T for (_, _, wh, _) in gates], axis=1)   # (4, 16)
    w = jnp.concatenate([w_x, w_h], axis=0)                            # (14, 16)
    b = jnp.concatenate([bx + bh for (_, bx, _, bh) in gates]).reshape(1, 4 * H)
    return w, b


def reference_forward(x, hidden, c, gates):
    """Pure-JAX reference matching the PyTorch module exactly (per-gate Linears)."""
    def lin(g):
        wx, bx, wh, bh = gates[g]
        return x @ wx.T + bx + hidden @ wh.T + bh
    i = jax.nn.sigmoid(lin(0))
    f = jax.nn.sigmoid(lin(1))
    g = jnp.tanh(lin(2))
    o = jax.nn.sigmoid(lin(3))
    c_new = f * c + i * g
    h_new = o * jnp.tanh(c_new)
    return h_new, c_new


if __name__ == "__main__":
    key = jax.random.PRNGKey(0)
    k_param, k_x, k_h, k_c = jax.random.split(key, 4)

    B = 2
    gates = init_params(k_param, IN, H)
    w_fused, b_fused = fuse_params(gates)

    x = jax.random.normal(k_x, (B, IN), jnp.float32)
    hidden = jax.random.normal(k_h, (B, H), jnp.float32)
    c = jax.random.normal(k_c, (B, H), jnp.float32)

    h_out, c_out = emb_lstm_forward(x, hidden, c, w_fused, b_fused)
    jax.block_until_ready((h_out, c_out))

    h_ref, c_ref = reference_forward(x, hidden, c, gates)
    assert jnp.allclose(h_out, h_ref, atol=1e-5, rtol=1e-5)
    assert jnp.allclose(c_out, c_ref, atol=1e-5, rtol=1e-5)

    print("KERNEL_OK")
</pallas_src>

<mosaic_0001>
module attributes {stable_mosaic.version = 11 : i64} {
  func.func @lstm_cell_kernel(%arg0: memref<2x14xf32, #tpu.memory_space<vmem>>, %arg1: memref<2x4xf32, #tpu.memory_space<vmem>>, %arg2: memref<14x16xf32, #tpu.memory_space<vmem>>, %arg3: memref<1x16xf32, #tpu.memory_space<vmem>>, %arg4: memref<2x8xf32, #tpu.memory_space<vmem>>) attributes {dimension_semantics = [], scalar_prefetch = 0 : i64, scratch_operands = 0 : i64, tpu.core_type = #tpu.core_type<tc>} {
    %c0 = arith.constant 0 : index
    %c0_0 = arith.constant 0 : index
    %0 = vector.load %arg0[%c0, %c0_0] : memref<2x14xf32, #tpu.memory_space<vmem>>, vector<2x14xf32>
    %c0_1 = arith.constant 0 : index
    %c0_2 = arith.constant 0 : index
    %1 = vector.load %arg1[%c0_1, %c0_2] : memref<2x4xf32, #tpu.memory_space<vmem>>, vector<2x4xf32>
    %c0_3 = arith.constant 0 : index
    %c0_4 = arith.constant 0 : index
    %2 = vector.load %arg2[%c0_3, %c0_4] : memref<14x16xf32, #tpu.memory_space<vmem>>, vector<14x16xf32>
    %cst = arith.constant dense<0.000000e+00> : vector<2x16xf32>
    %3 = tpu.matmul %0, %2, %cst {dimension_numbers = #tpu.dot_dimension_numbers<[1], [0], [0], [1], [0, 0, 1, 1], [], []>} : vector<2x14xf32>, vector<14x16xf32>, vector<2x16xf32> -> vector<2x16xf32>
    %c0_5 = arith.constant 0 : index
    %c0_6 = arith.constant 0 : index
    %4 = vector.load %arg3[%c0_5, %c0_6] : memref<1x16xf32, #tpu.memory_space<vmem>>, vector<1x16xf32>
    %5 = vector.broadcast %4 : vector<1x16xf32> to vector<2x16xf32>
    %6 = arith.addf %3, %5 : vector<2x16xf32>
    %7 = vector.extract_strided_slice %6 {offsets = [0, 0], sizes = [2, 4], strides = [1, 1]} : vector<2x16xf32> to vector<2x4xf32>
    %8 = arith.negf %7 : vector<2x4xf32>
    %9 = math.exp %8 : vector<2x4xf32>
    %cst_7 = arith.constant 1.000000e+00 : f32
    %10 = vector.broadcast %cst_7 : f32 to vector<2x4xf32>
    %11 = arith.addf %10, %9 : vector<2x4xf32>
    %12 = arith.divf %10, %11 : vector<2x4xf32>
    %13 = vector.extract_strided_slice %6 {offsets = [0, 4], sizes = [2, 4], strides = [1, 1]} : vector<2x16xf32> to vector<2x4xf32>
    %14 = arith.negf %13 : vector<2x4xf32>
    %15 = math.exp %14 : vector<2x4xf32>
    %cst_8 = arith.constant 1.000000e+00 : f32
    %16 = vector.broadcast %cst_8 : f32 to vector<2x4xf32>
    %17 = arith.addf %16, %15 : vector<2x4xf32>
    %18 = arith.divf %16, %17 : vector<2x4xf32>
    %19 = vector.extract_strided_slice %6 {offsets = [0, 8], sizes = [2, 4], strides = [1, 1]} : vector<2x16xf32> to vector<2x4xf32>
    %20 = math.tanh %19 : vector<2x4xf32>
    %21 = vector.extract_strided_slice %6 {offsets = [0, 12], sizes = [2, 4], strides = [1, 1]} : vector<2x16xf32> to vector<2x4xf32>
    %22 = arith.negf %21 : vector<2x4xf32>
    %23 = math.exp %22 : vector<2x4xf32>
    %cst_9 = arith.constant 1.000000e+00 : f32
    %24 = vector.broadcast %cst_9 : f32 to vector<2x4xf32>
    %25 = arith.addf %24, %23 : vector<2x4xf32>
    %26 = arith.divf %24, %25 : vector<2x4xf32>
    %27 = arith.mulf %18, %1 : vector<2x4xf32>
    %28 = arith.mulf %12, %20 : vector<2x4xf32>
    %29 = arith.addf %27, %28 : vector<2x4xf32>
    %30 = math.tanh %29 : vector<2x4xf32>
    %31 = arith.mulf %26, %30 : vector<2x4xf32>
    %c0_10 = arith.constant 0 : index
    %c0_11 = arith.constant 0 : index
    %32 = vector.load %arg4[%c0_10, %c0_11] : memref<2x8xf32, #tpu.memory_space<vmem>>, vector<2x4xf32>
    tpu.vector_store %arg4[%c0_10, %c0_11], %31 {strides = array<i32>} : memref<2x8xf32, #tpu.memory_space<vmem>>, vector<2x4xf32>,
    %c0_12 = arith.constant 0 : index
    %c4 = arith.constant 4 : index
    %33 = vector.load %arg4[%c0_12, %c4] : memref<2x8xf32, #tpu.memory_space<vmem>>, vector<2x4xf32>
    tpu.vector_store %arg4[%c0_12, %c4], %29 {strides = array<i32>} : memref<2x8xf32, #tpu.memory_space<vmem>>, vector<2x4xf32>,
    return
  }
}

</mosaic_0001>

<llo_original>
// kernel: tpu_custom_call.1
$region0: #{tpu_custom_call.1}
  #allocation0 [shape = 'u32[]', space=smem, size = 0x4, offset = 0x4, fixed_abs, tag = 'smem constant byte address 0x4 - core index']
  #allocation1 [shape = 'u32[144,128]{1,0:T(1,128)}', space=vmem, size = 0x12000, scoped, tag = 'internal scratch']
  %s0 = inlined_call_operand.hbm [shape: f32[2,14], index: 0, kind: input, shape index: {}]
  %s1 = inlined_call_operand.hbm [shape: f32[2,4], index: 1, kind: input, shape index: {}]
  %s2 = inlined_call_operand.hbm [shape: f32[14,16], index: 2, kind: input, shape index: {}]
  %s3 = inlined_call_operand.vmem [shape: f32[1,16], index: 3, kind: input, shape index: {}]
  %s4 = inlined_call_operand.hbm [shape: f32[2,8], index: 4, kind: output, shape index: {}]
  %s5 = sld [smem:[#allocation0]]
  $region38: #{tpu_custom_call.1} parent=0
    _
  %s7 = ssub.s32 1, %s5
  %s8 = scalar_select 0, %s7, %s5
  $region1: #{tpu_custom_call.1} parent=0
    #allocation2 [shape = 'u8[1024]{0}', space=vmem, size = 0x400, scoped, tag = 'input window, operand 0, single buffered']
    #allocation3 [shape = 's32[1]{0}', space=sflag, size = 0x4, scoped, tag = 'scoped memory for tpu_custom_call.1']
    #allocation4 [shape = 's32[1]{0}', space=sflag, size = 0x4, scoped, tag = 'scoped memory for tpu_custom_call.1']
    #allocation5 [shape = 'u8[1024]{0}', space=vmem, size = 0x400, scoped, tag = 'input window, operand 1, single buffered']
    #allocation6 [shape = 's32[1]{0}', space=sflag, size = 0x4, scoped, tag = 'scoped memory for tpu_custom_call.1']
    #allocation7 [shape = 'u8[8192]{0}', space=vmem, size = 0x2000, scoped, tag = 'input window, operand 2, single buffered']
    #allocation8 [shape = 'u8[1024]{0}', space=vmem, size = 0x400, scoped, tag = 'output window, operand 0, single buffered']
    %9 = vsyncpa [#allocation3], 0
    %10 = vsyncpa [#allocation6], 0
    %11 = vsyncpa [#allocation4], 0
    // Predicated region
    $region2: #{tpu_custom_call.1} parent=1 // pred_check
      _
    $region3: #{tpu_custom_call.1} parent=1 // pred_check_branch
      %13 = sbr.rel (0) target = $region5
    $region4: #{tpu_custom_call.1} parent=1 // pred_region
      %s15 = ssub.s32 32, 32
      %16 = vsyncadd [#allocation3], %s15
      %s18 = sshll.u32 [#allocation2], 4
      %s19 = int_to_ptr.vmem [resolvable:$true] %s18
      %21 = dma.hbm_to_vmem [thread:$0]  %s0, 32, %s19, [#allocation3]
    $region5: #{tpu_custom_call.1} parent=1 // pred_fallthru
      _
    // Predicated region
    $region6: #{tpu_custom_call.1} parent=1 // pred_check
      _
    $region7: #{tpu_custom_call.1} parent=1 // pred_check_branch
      %23 = sbr.rel (0) target = $region9
    $region8: #{tpu_custom_call.1} parent=1 // pred_region
      %s25 = ssub.s32 32, 32
      %26 = vsyncadd [#allocation6], %s25
      %s28 = sshll.u32 [#allocation5], 4
      %s29 = int_to_ptr.vmem [resolvable:$true] %s28
      %31 = dma.hbm_to_vmem [thread:$0]  %s1, 32, %s29, [#allocation6]
    $region9: #{tpu_custom_call.1} parent=1 // pred_fallthru
      _
    // Predicated region
    $region10: #{tpu_custom_call.1} parent=1 // pred_check
      _
    $region11: #{tpu_custom_call.1} parent=1 // pred_check_branch
      %33 = sbr.rel (0) target = $region13
    $region12: #{tpu_custom_call.1} parent=1 // pred_region
      %s35 = ssub.s32 256, 256
      %36 = vsyncadd [#allocation6], %s35
      %s37 = sshll.u32 [#allocation7], 4
      %s38 = int_to_ptr.vmem [resolvable:$true] %s37
      %43 = dma.hbm_to_vmem [thread:$0]  %s2, 256, %s38, [#allocation6], 128, 128, 8
    $region13: #{tpu_custom_call.1} parent=1 // pred_fallthru
      _
    // Predicated region
    $region14: #{tpu_custom_call.1} parent=1 // pred_check
      _
    $region15: #{tpu_custom_call.1} parent=1 // pred_check_branch
      %45 = sbr.rel (0) target = $region17
    $region16: #{tpu_custom_call.1} parent=1 // pred_region
      _
    $region17: #{tpu_custom_call.1} parent=1 // pred_fallthru
      _
    // Predicated region
    $region18: #{tpu_custom_call.1} parent=1 // pred_check
      _
    $region19: #{tpu_custom_call.1} parent=1 // pred_check_branch
      %47 = sbr.rel (0) target = $region21
    $region20: #{tpu_custom_call.1} parent=1 // pred_region
      %48 = dma.done [#allocation3], 32
    $region21: #{tpu_custom_call.1} parent=1 // pred_fallthru
      _
    // Predicated region
    $region22: #{tpu_custom_call.1} parent=1 // pred_check
      _
    $region23: #{tpu_custom_call.1} parent=1 // pred_check_branch
      %50 = sbr.rel (0) target = $region25
    $region24: #{tpu_custom_call.1} parent=1 // pred_region
      %51 = dma.done [#allocation6], 32
    $region25: #{tpu_custom_call.1} parent=1 // pred_fallthru
      _
    // Predicated region
    $region26: #{tpu_custom_call.1} parent=1 // pred_check
      _
    $region27: #{tpu_custom_call.1} parent=1 // pred_check_branch
      %53 = sbr.rel (0) target = $region29
    $region28: #{tpu_custom_call.1} parent=1 // pred_region
      %54 = dma.done [#allocation6], 256
    $region29: #{tpu_custom_call.1} parent=1 // pred_fallthru
      _
    %v55 = vld [vmem:[#allocation2] sm:$0x3]
    %v56 = vld [vmem:[#allocation5] sm:$0x3]
    %v57 = vld [vmem:[#allocation7] sm:$0xff]
    %v58 = vld [vmem:[#allocation7 + $0x8] sm:$0x3f]
    %v59 = vld [vmem:[%s3] sm:$0x1]
    %v61 = vlaneseq
    %v62 = vshrl.u32 %v61, 7
    %v63 = vsub.s32 0, %v62
    %v64 = vrot.slane %v59, %v63
    %vm66 = vcmask 113664
    %v68 = vsel %vm66, %v55, 0
    %vm70 = vcmask 1045504
    %v72 = vsel %vm70, %v58, 0
    %74 = vmatprep.subr.mxu0 0.0
    %75 = vmatpush1.msra.mxu0 0.0
    %76 = vmatprep.subr.mxu0 0.0
    %77 = vmatpush1.msra.mxu0 0.0
    %78 = vmatprep.subr.mxu0 0.0
    %79 = vmatpush1.msra.mxu0 0.0
    %80 = vmatprep.subr.mxu0 0.0
    %81 = vmatpush1.msra.mxu0 0.0
    %82 = vmatprep.subr.mxu0 0.0
    %83 = vmatpush1.msra.mxu0 0.0
    %84 = vmatprep.subr.mxu0 0.0
    %85 = vmatpush1.msra.mxu0 0.0
    %86 = vmatprep.subr.mxu0 0.0
    %87 = vmatpush1.msra.mxu0 0.0
    %88 = vmatprep.subr.mxu0 0.0
    %89 = vmatpush1.msra.mxu0 0.0
    %90 = vmatprep.subr.mxu0 0.0
    %91 = vmatpush1.msra.mxu0 0.0
    %92 = vmatprep.subr.mxu0 0.0
    %93 = vmatpush1.msra.mxu0 0.0
    %94 = vmatprep.subr.mxu0 0.0
    %95 = vmatpush1.msra.mxu0 0.0
    %96 = vmatprep.subr.mxu0 0.0
    %97 = vmatpush1.msra.mxu0 0.0
    %98 = vmatprep.subr.mxu0 0.0
    %99 = vmatpush1.msra.mxu0 0.0
    %100 = vmatprep.subr.mxu0 0.0
    %101 = vmatpush1.msra.mxu0 0.0
    %102 = vmatprep.subr.mxu0 0.0
    %103 = vmatpush1.msra.mxu0 %v72
    %104 = vmatprep.subr.mxu0 0.0
    %105 = vmatpush1.msra.mxu0 %v57
    %106 = vmatprep.subr.mxu0 0.0
    %107 = vmatpush2.msra.mxu0 0.0
    %108 = vmatprep.subr.mxu0 0.0
    %109 = vmatpush2.msra.mxu0 0.0
    %110 = vmatprep.subr.mxu0 0.0
    %111 = vmatpush2.msra.mxu0 0.0
    %112 = vmatprep.subr.mxu0 0.0
    %113 = vmatpush2.msra.mxu0 0.0
    %114 = vmatprep.subr.mxu0 0.0
    %115 = vmatpush2.msra.mxu0 0.0
    %116 = vmatprep.subr.mxu0 0.0
    %117 = vmatpush2.msra.mxu0 0.0
    %118 = vmatprep.subr.mxu0 0.0
    %119 = vmatpush2.msra.mxu0 0.0
    %120 = vmatprep.subr.mxu0 0.0
    %121 = vmatpush2.msra.mxu0 0.0
    %122 = vmatprep.subr.mxu0 0.0
    %123 = vmatpush2.msra.mxu0 0.0
    %124 = vmatprep.subr.mxu0 0.0
    %125 = vmatpush2.msra.mxu0 0.0
    %126 = vmatprep.subr.mxu0 0.0
    %127 = vmatpush2.msra.mxu0 0.0
    %128 = vmatprep.subr.mxu0 0.0
    %129 = vmatpush2.msra.mxu0 0.0
    %130 = vmatprep.subr.mxu0 0.0
    %131 = vmatpush2.msra.mxu0 0.0
    %132 = vmatprep.subr.mxu0 0.0
    %133 = vmatpush2.msra.mxu0 0.0
    %134 = vmatprep.subr.mxu0 0.0
    %135 = vmatpush2.msra.mxu0 0.0
    %136 = vmatprep.subr.mxu0 0.0
    %137 = vmatpush2.msra.mxu0 0.0
    %138 = vmatprep.mubr.f32.mxu0 0.0
    %139 = vmatmul.mubr.f32.gmra.mxu0 %v68
    %v140 = vpop.f32.mrf.mxu0
    %v141 = vadd.f32 %v64, %v140
    %v142 = vpop.f32.mrf.mxu0
    %143 = vdwg.mxu0
    %v144 = vxor.u32 %v141, 2147483648
    %v145 = vmul.f32 %v144, 1.442695
    %v146 = vpow.pop %v145
    %v147 = vadd.f32 %v146, 1.0
    %v148 = vrcp.pop %v147
    %v149 = vmul.f32 1.0, %v148
    %v150 = vtanh.pop %v141
    %152 = vrot.lane.b32.xlu0 %v56, 4
    %v153 = vpop.permute.xlu0 %152
    %v155 = vmul.f32 %v149, %v153
    %157 = vrot.lane.b32.xlu0 %v150, 120
    %v158 = vpop.permute.xlu0 %157
    %v160 = vmul.f32 %v149, %v158
    %162 = vrot.lane.b32.xlu0 %v160, 4
    %v163 = vpop.permute.xlu0 %162
    %v165 = vadd.f32 %v155, %v163
    %v166 = vtanh.pop %v165
    %168 = vrot.lane.b32.xlu0 %v166, 8
    %v169 = vpop.permute.xlu0 %168
    %v171 = vmul.f32 %v149, %v169
    %173 = vrot.lane.b32.xlu0 %v171, 116
    %v174 = vpop.permute.xlu0 %173
    %vm176 = vcmask 25600
    %177 = vst.msk [vmem:[#allocation8] sm:$0x3] %vm176, %v174
    %vm178 = vcmask 58400
    %179 = vst.msk [vmem:[#allocation8] sm:$0x3] %vm178, %v165
    // Predicated region
    $region30: #{tpu_custom_call.1} parent=1 // pred_check
      _
    $region31: #{tpu_custom_call.1} parent=1 // pred_check_branch
      %181 = sbr.rel (0) target = $region33
    $region32: #{tpu_custom_call.1} parent=1 // pred_region
      %s183 = ssub.s32 32, 32
      %184 = vsyncadd [#allocation4], %s183
      %s186 = sshll.u32 [#allocation8], 4
      %s187 = int_to_ptr.vmem [resolvable:$true] %s186
      %189 = dma.vmem_to_hbm [thread:$0]  %s187, 32, %s4, [#allocation4]
    $region33: #{tpu_custom_call.1} parent=1 // pred_fallthru
      _
    // Predicated region
    $region34: #{tpu_custom_call.1} parent=1 // pred_check
      _
    $region35: #{tpu_custom_call.1} parent=1 // pred_check_branch
      %191 = sbr.rel (0) target = $region37
    $region36: #{tpu_custom_call.1} parent=1 // pred_region
      %192 = dma.done [#allocation4], 32
    $region37: #{tpu_custom_call.1} parent=1 // pred_fallthru
      _
    %193 = vsyncpa [#allocation3], 1
    %194 = vsyncpa [#allocation6], 1
    %195 = vsyncpa [#allocation4], 1

</llo_original>
